<compile_context>
chip_gen: v7x
topology: tpu7x:2x2x1
jax: 0.10.0
libtpu: 0.0.40
codegen_flags: <defaults>
</compile_context>

<pallas_src>
import functools

import jax
import jax.numpy as jnp
from jax.experimental import pallas as pl
from jax.experimental.pallas import tpu as pltpu

_PAIR_EPS = 1e-6   # F.pairwise_distance default eps
_SUBLANES = 8
_LANES = 128


def _contrast_loss_kernel(o_ref, eq_ref, out_ref, *, margin, d, group,
                          n_rows, tile_rows, inv_n, blocks_per_split):
    # o_ref   : (2, tile_rows, group*d) native dtype in VMEM (both halves, one DMA)
    # eq_ref  : (tile_rows, group) f32 in VMEM  (1.0 iff label_1 == label_2)
    # out_ref : (8, 128) f32 resident accumulator block (one per split)
    s = pl.program_id(0)   # partial-sum split (parallel / megacore axis)
    j = pl.program_id(1)   # row-tile index within the split (reduction axis)

    @pl.when(j == 0)
    def _init():
        out_ref[...] = jnp.zeros_like(out_ref)

    o1 = o_ref[0].astype(jnp.float32)
    o2 = o_ref[1].astype(jnp.float32)
    diff = o1 - o2 + _PAIR_EPS
    sq = diff * diff                                      # (tile_rows, group*d), lane-dense

    if group == 1:
        d2 = jnp.sum(sq, axis=-1, keepdims=True)          # (tile_rows, 1)
    else:
        # Segmented lane reduction on the (idle) MXU:
        #   (tile_rows, G*D) @ (G*D, G) -> (tile_rows, G), seg[k, g] = 1 iff k in [g*D,(g+1)*D)
        gd = group * d
        k = jax.lax.broadcasted_iota(jnp.int32, (gd, group), 0)
        g = jax.lax.broadcasted_iota(jnp.int32, (gd, group), 1)
        seg = jnp.logical_and(k >= g * d, k < (g + 1) * d).astype(jnp.float32)
        d2 = jnp.dot(sq, seg, preferred_element_type=jnp.float32)

    dist = jnp.sqrt(d2)                                   # (tile_rows, group)
    eq = eq_ref[...]
    hinge = jnp.maximum(margin - dist, 0.0)
    term = eq * d2 + (1.0 - eq) * (hinge * hinge)         # (tile_rows, group)

    # Only tail / overshoot tiles pay for the row mask.
    row0 = (s * blocks_per_split + j) * tile_rows         # unclamped packed-row offset
    in_bounds = row0 + tile_rows <= n_rows

    @pl.when(in_bounds)
    def _full_tile():
        out_ref[...] += jnp.sum(term)

    @pl.when(jnp.logical_not(in_bounds))
    def _masked_tile():
        rows = row0 + jax.lax.broadcasted_iota(jnp.int32, term.shape, 0)
        out_ref[...] += jnp.sum(jnp.where(rows < n_rows, term, 0.0))

    @pl.when(j == pl.num_programs(1) - 1)
    def _finalize():
        out_ref[...] = out_ref[...] * inv_n               # multiply by 1/N (no divide)


def contrast_loss(output, labels, margin=2.0, *, num_splits=1,
                  tile_vmem_budget=24 << 20):
    """Pallas TPU implementation of ContrastLoss.forward.

    num_splits: 1 for single-TensorCore chips (v5e/v6e); 2 on v7x to shard the
    row loop across both TensorCores.
    """
    two_n, d = output.shape
    assert two_n % 2 == 0, "first dim of output must be even (2N)"
    n = two_n // 2

    # Lane packing: fold `group` consecutive pair-rows into the lane dim when D < 128.
    group = min(_LANES // d, n) if d < _LANES else 1
    while group > 1 and n % group != 0:
        group -= 1
    group = max(group, 1)
    gd = group * d
    n_rows = n // group                                   # packed logical rows per half

    # Metadata-only reshapes: no HBM copy, no wrapper slicing / upcasting.
    out_r = output.reshape(2, n_rows, gd)
    eq = (labels[:n] == labels[n:]).astype(jnp.float32).reshape(n_rows, group)

    # Row tile: multiple of 8 sublanes, sized from the VMEM budget.  Budget counts the
    # 2 halves x 2 pipeline buffers in native dtype PLUS ~4 f32 in-kernel temporaries
    # (upcasts of o1/o2, diff, sq) and the eq side input.
    itemsize = jnp.dtype(output.dtype).itemsize
    bytes_per_row = gd * (4 * itemsize + 4 * 4) + group * 4 * 2
    cap = max(_SUBLANES, (tile_vmem_budget // bytes_per_row) // _SUBLANES * _SUBLANES)
    rows_rounded = max(_SUBLANES, (n_rows + _SUBLANES - 1) // _SUBLANES * _SUBLANES)
    tile_rows = int(min(cap, rows_rounded))

    n_blocks = (n_rows + tile_rows - 1) // tile_rows
    blocks_per_split = (n_blocks + num_splits - 1) // num_splits

    def row_block(s, j):
        # Clamp so overshooting splits re-read an in-range tile; identical consecutive
        # block indices skip the DMA and the kernel masks their rows to exactly 0.
        return jnp.minimum(s * blocks_per_split + j, n_blocks - 1)

    kernel = functools.partial(
        _contrast_loss_kernel, margin=float(margin), d=d, group=group,
        n_rows=n_rows, tile_rows=tile_rows, inv_n=1.0 / float(n),
        blocks_per_split=blocks_per_split)

    partials = pl.pallas_call(
        kernel,
        out_shape=jax.ShapeDtypeStruct((num_splits * _SUBLANES, _LANES), jnp.float32),
        grid_spec=pltpu.PrefetchScalarGridSpec(
            num_scalar_prefetch=0,
            grid=(num_splits, blocks_per_split),
            in_specs=[
                # Both halves of `output` in one fused block (one DMA per step).
                pl.BlockSpec((2, tile_rows, gd), lambda s, j: (0, row_block(s, j), 0)),
                # Label-equality side input.
                pl.BlockSpec((tile_rows, group), lambda s, j: (row_block(s, j), 0)),
            ],
            # One resident (8, 128) accumulator block per split.
            out_specs=pl.BlockSpec((_SUBLANES, _LANES), lambda s, j: (s, 0)),
        ),
        compiler_params=pltpu.CompilerParams(
            dimension_semantics=("parallel", "arbitrary"),
            vmem_limit_bytes=48 * 1024 * 1024,   # <= v7x 64 MiB ceiling, > v5e 16 MiB default
        ),
    )(out_r, eq)

    # Each split's block holds its (already /N) partial sum broadcast; add splits.
    return jnp.sum(partials[::_SUBLANES, 0])


def _contrast_loss_ref(output, labels, margin=2.0):
    """Pure-JAX reference mirroring the PyTorch module."""
    two_n = output.shape[0]
    n = two_n // 2
    o = output.astype(jnp.float32)
    o1, o2 = o[:n], o[n:]
    l1, l2 = labels[:n], labels[n:]
    label = (l1 == l2).astype(jnp.float32)
    dist = jnp.sqrt(jnp.sum((o1 - o2 + _PAIR_EPS) ** 2, axis=-1))
    return jnp.mean(label * dist * dist
                    + (1.0 - label) * jnp.maximum(margin - dist, 0.0) ** 2)


if __name__ == "__main__":
    key = jax.random.PRNGKey(0)
    k1, k2, k3, k4, k5, k6 = jax.random.split(key, 6)

    # Primary case: output (2N, D) = (16, 32), labels (2N,) = (16,)  -> lane-packed (G=4).
    output = jax.random.normal(k1, (16, 32), dtype=jnp.float32)
    labels = jax.random.randint(k2, (16,), 0, 4, dtype=jnp.int32)
    loss = jax.block_until_ready(contrast_loss(output, labels, margin=2.0))
    ref = _contrast_loss_ref(output, labels, margin=2.0)
    assert jnp.allclose(loss, ref, rtol=1e-5, atol=1e-5), (loss, ref)

    # Ragged case: N = 13 (not a multiple of 8), D = 40 -> packing falls back, row masking.
    output2 = jax.random.normal(k3, (26, 40), dtype=jnp.float32)
    labels2 = jax.random.randint(k4, (26,), 0, 3, dtype=jnp.int32)
    loss2 = jax.block_until_ready(contrast_loss(output2, labels2, margin=2.0))
    ref2 = _contrast_loss_ref(output2, labels2, margin=2.0)
    assert jnp.allclose(loss2, ref2, rtol=1e-5, atol=1e-5), (loss2, ref2)

    # bf16 activations: DMA'd in native dtype, cast to f32 inside the kernel.
    output3 = output.astype(jnp.bfloat16)
    loss3 = jax.block_until_ready(contrast_loss(output3, labels, margin=2.0))
    ref3 = _contrast_loss_ref(output3, labels, margin=2.0)
    assert jnp.allclose(loss3, ref3, rtol=1e-4, atol=1e-4), (loss3, ref3)

    # Multi-tile + 2-split path: tiny VMEM budget forces several grid steps per split.
    output4 = jax.random.normal(k5, (256, 32), dtype=jnp.float32)
    labels4 = jax.random.randint(k6, (256,), 0, 5, dtype=jnp.int32)
    loss4 = jax.block_until_ready(
        contrast_loss(output4, labels4, margin=1.5, num_splits=2, tile_vmem_budget=1 << 16))
    ref4 = _contrast_loss_ref(output4, labels4, margin=1.5)
    assert jnp.allclose(loss4, ref4, rtol=1e-5, atol=1e-5), (loss4, ref4)

    print("KERNEL_OK")
</pallas_src>

<mosaic_0001>
module attributes {stable_mosaic.version = 11 : i64} {
  func.func @_contrast_loss_kernel(%arg0: i32, %arg1: i32, %arg2: memref<2x8x128xf32, #tpu.memory_space<vmem>>, %arg3: memref<8x4xf32, #tpu.memory_space<vmem>>, %arg4: memref<8x128xf32, #tpu.memory_space<vmem>>) attributes {dimension_semantics = [#tpu.dimension_semantics<parallel>, #tpu.dimension_semantics<arbitrary>], iteration_bounds = array<i64: 1, 1>, scalar_prefetch = 0 : i64, scratch_operands = 0 : i64, tpu.core_type = #tpu.core_type<tc>, window_params = [{transform_indices = @transform_0, window_bounds = array<i64: 2, 8, 128>}, {transform_indices = @transform_1, window_bounds = array<i64: 8, 4>}, {transform_indices = @transform_2, window_bounds = array<i64: 8, 128>}]} {
    %c0_i32 = arith.constant 0 : i32
    %0 = arith.cmpi eq, %arg1, %c0_i32 : i32
    %1 = arith.extui %0 : i1 to i32
    %c0_i32_0 = arith.constant 0 : i32
    %2 = arith.cmpi ne, %1, %c0_i32_0 : i32
    scf.if %2 {
      %cst_18 = arith.constant 0.000000e+00 : f32
      %50 = vector.broadcast %cst_18 : f32 to vector<8x128xf32>
      %c0_19 = arith.constant 0 : index
      %c0_20 = arith.constant 0 : index
      %51 = vector.load %arg4[%c0_19, %c0_20] : memref<8x128xf32, #tpu.memory_space<vmem>>, vector<8x128xf32>
      tpu.vector_store %arg4[%c0_19, %c0_20], %50 {strides = array<i32>} : memref<8x128xf32, #tpu.memory_space<vmem>>, vector<8x128xf32>,
    } else {
    }
    %c0 = arith.constant 0 : index
    %c0_1 = arith.constant 0 : index
    %c0_2 = arith.constant 0 : index
    %3 = vector.load %arg2[%c0, %c0_1, %c0_2] : memref<2x8x128xf32, #tpu.memory_space<vmem>>, vector<1x8x128xf32>
    %4 = vector.shape_cast %3 : vector<1x8x128xf32> to vector<8x128xf32>
    %c1 = arith.constant 1 : index
    %c0_3 = arith.constant 0 : index
    %c0_4 = arith.constant 0 : index
    %5 = vector.load %arg2[%c1, %c0_3, %c0_4] : memref<2x8x128xf32, #tpu.memory_space<vmem>>, vector<1x8x128xf32>
    %6 = vector.shape_cast %5 : vector<1x8x128xf32> to vector<8x128xf32>
    %7 = arith.subf %4, %6 : vector<8x128xf32>
    %cst = arith.constant 9.99999997E-7 : f32
    %8 = vector.broadcast %cst : f32 to vector<8x128xf32>
    %9 = arith.addf %7, %8 : vector<8x128xf32>
    %10 = arith.mulf %9, %9 : vector<8x128xf32>
    %11 = tpu.iota {dimensions = array<i32: 0>} : vector<128x4xi32>
    %12 = tpu.iota {dimensions = array<i32: 1>} : vector<128x4xi32>
    %c32_i32 = arith.constant 32 : i32
    %13 = vector.broadcast %c32_i32 : i32 to vector<128x4xi32>
    %14 = arith.muli %12, %13 : vector<128x4xi32>
    %15 = arith.cmpi sge, %11, %14 : vector<128x4xi32>
    %c1_i32 = arith.constant 1 : i32
    %16 = vector.broadcast %c1_i32 : i32 to vector<128x4xi32>
    %17 = arith.addi %12, %16 : vector<128x4xi32>
    %c32_i32_5 = arith.constant 32 : i32
    %18 = vector.broadcast %c32_i32_5 : i32 to vector<128x4xi32>
    %19 = arith.muli %17, %18 : vector<128x4xi32>
    %20 = arith.cmpi slt, %11, %19 : vector<128x4xi32>
    %21 = arith.andi %15, %20 : vector<128x4xi1>
    %22 = arith.extui %21 : vector<128x4xi1> to vector<128x4xi32>
    %23 = arith.sitofp %22 : vector<128x4xi32> to vector<128x4xf32>
    %cst_6 = arith.constant dense<0.000000e+00> : vector<8x4xf32>
    %24 = tpu.matmul %10, %23, %cst_6 {dimension_numbers = #tpu.dot_dimension_numbers<[1], [0], [0], [1], [0, 0, 1, 1], [], []>} : vector<8x128xf32>, vector<128x4xf32>, vector<8x4xf32> -> vector<8x4xf32>
    %25 = math.sqrt %24 : vector<8x4xf32>
    %c0_7 = arith.constant 0 : index
    %c0_8 = arith.constant 0 : index
    %26 = vector.load %arg3[%c0_7, %c0_8] : memref<8x4xf32, #tpu.memory_space<vmem>>, vector<8x4xf32>
    %cst_9 = arith.constant 2.000000e+00 : f32
    %27 = vector.broadcast %cst_9 : f32 to vector<8x4xf32>
    %28 = arith.subf %27, %25 : vector<8x4xf32>
    %cst_10 = arith.constant 0.000000e+00 : f32
    %29 = vector.broadcast %cst_10 : f32 to vector<8x4xf32>
    %30 = arith.maximumf %28, %29 : vector<8x4xf32>
    %31 = arith.mulf %26, %24 : vector<8x4xf32>
    %cst_11 = arith.constant 1.000000e+00 : f32
    %32 = vector.broadcast %cst_11 : f32 to vector<8x4xf32>
    %33 = arith.subf %32, %26 : vector<8x4xf32>
    %34 = arith.mulf %30, %30 : vector<8x4xf32>
    %35 = arith.mulf %33, %34 : vector<8x4xf32>
    %36 = arith.addf %31, %35 : vector<8x4xf32>
    %c1_i32_12 = arith.constant 1 : i32
    %37 = arith.muli %arg0, %c1_i32_12 : i32
    %38 = arith.addi %37, %arg1 : i32
    %c8_i32 = arith.constant 8 : i32
    %39 = arith.muli %38, %c8_i32 : i32
    %c8_i32_13 = arith.constant 8 : i32
    %40 = arith.addi %39, %c8_i32_13 : i32
    %c2_i32 = arith.constant 2 : i32
    %41 = arith.cmpi sle, %40, %c2_i32 : i32
    %42 = arith.extui %41 : i1 to i32
    %c0_i32_14 = arith.constant 0 : i32
    %43 = arith.cmpi ne, %42, %c0_i32_14 : i32
    scf.if %43 {
      %c0_18 = arith.constant 0 : index
      %c0_19 = arith.constant 0 : index
      %50 = vector.load %arg4[%c0_18, %c0_19] : memref<8x128xf32, #tpu.memory_space<vmem>>, vector<8x128xf32>
      %51 = vector.shape_cast %36 : vector<8x4xf32> to vector<1x8x4xf32>
      %cst_20 = arith.constant dense<0.000000e+00> : vector<1xf32>
      %52 = vector.multi_reduction <add>, %51, %cst_20 [1, 2] : vector<1x8x4xf32> to vector<1xf32>
      %53 = vector.shape_cast %52 : vector<1xf32> to vector<1x1x1xf32>
      %54 = vector.extract %53[0, 0, 0] : f32 from vector<1x1x1xf32>
      %55 = vector.broadcast %54 : f32 to vector<8x128xf32>
      %56 = arith.addf %50, %55 : vector<8x128xf32>
      %c0_21 = arith.constant 0 : index
      %c0_22 = arith.constant 0 : index
      %57 = vector.load %arg4[%c0_21, %c0_22] : memref<8x128xf32, #tpu.memory_space<vmem>>, vector<8x128xf32>
      tpu.vector_store %arg4[%c0_21, %c0_22], %56 {strides = array<i32>} : memref<8x128xf32, #tpu.memory_space<vmem>>, vector<8x128xf32>,
    } else {
    }
    %true = arith.constant true
    %44 = arith.xori %41, %true : i1
    %45 = arith.extui %44 : i1 to i32
    %c0_i32_15 = arith.constant 0 : i32
    %46 = arith.cmpi ne, %45, %c0_i32_15 : i32
    scf.if %46 {
      %50 = tpu.iota {dimensions = array<i32: 0>} : vector<8x4xi32>
      %51 = vector.broadcast %39 : i32 to vector<8x4xi32>
      %52 = arith.addi %51, %50 : vector<8x4xi32>
      %c0_18 = arith.constant 0 : index
      %c0_19 = arith.constant 0 : index
      %53 = vector.load %arg4[%c0_18, %c0_19] : memref<8x128xf32, #tpu.memory_space<vmem>>, vector<8x128xf32>
      %c2_i32_20 = arith.constant 2 : i32
      %54 = vector.broadcast %c2_i32_20 : i32 to vector<8x4xi32>
      %55 = arith.cmpi slt, %52, %54 : vector<8x4xi32>
      %cst_21 = arith.constant 0.000000e+00 : f32
      %56 = vector.broadcast %cst_21 : f32 to vector<8x4xf32>
      %57 = arith.select %55, %36, %56 : vector<8x4xi1>, vector<8x4xf32>
      %58 = vector.shape_cast %57 : vector<8x4xf32> to vector<1x8x4xf32>
      %cst_22 = arith.constant dense<0.000000e+00> : vector<1xf32>
      %59 = vector.multi_reduction <add>, %58, %cst_22 [1, 2] : vector<1x8x4xf32> to vector<1xf32>
      %60 = vector.shape_cast %59 : vector<1xf32> to vector<1x1x1xf32>
      %61 = vector.extract %60[0, 0, 0] : f32 from vector<1x1x1xf32>
      %62 = vector.broadcast %61 : f32 to vector<8x128xf32>
      %63 = arith.addf %53, %62 : vector<8x128xf32>
      %c0_23 = arith.constant 0 : index
      %c0_24 = arith.constant 0 : index
      %64 = vector.load %arg4[%c0_23, %c0_24] : memref<8x128xf32, #tpu.memory_space<vmem>>, vector<8x128xf32>
      tpu.vector_store %arg4[%c0_23, %c0_24], %63 {strides = array<i32>} : memref<8x128xf32, #tpu.memory_space<vmem>>, vector<8x128xf32>,
    } else {
    }
    %c0_i32_16 = arith.constant 0 : i32
    %47 = arith.cmpi eq, %arg1, %c0_i32_16 : i32
    %48 = arith.extui %47 : i1 to i32
    %c0_i32_17 = arith.constant 0 : i32
    %49 = arith.cmpi ne, %48, %c0_i32_17 : i32
    scf.if %49 {
      %c0_18 = arith.constant 0 : index
      %c0_19 = arith.constant 0 : index
      %50 = vector.load %arg4[%c0_18, %c0_19] : memref<8x128xf32, #tpu.memory_space<vmem>>, vector<8x128xf32>
      %cst_20 = arith.constant 1.250000e-01 : f32
      %51 = vector.broadcast %cst_20 : f32 to vector<8x128xf32>
      %52 = arith.mulf %50, %51 : vector<8x128xf32>
      %c0_21 = arith.constant 0 : index
      %c0_22 = arith.constant 0 : index
      %53 = vector.load %arg4[%c0_21, %c0_22] : memref<8x128xf32, #tpu.memory_space<vmem>>, vector<8x128xf32>
      tpu.vector_store %arg4[%c0_21, %c0_22], %52 {strides = array<i32>} : memref<8x128xf32, #tpu.memory_space<vmem>>, vector<8x128xf32>,
    } else {
    }
    return
  }
  func.func @transform_0(%arg0: i32, %arg1: i32) -> (i32, i32, i32) {
    %c1_i32 = arith.constant 1 : i32
    %0 = arith.muli %arg0, %c1_i32 : i32
    %1 = arith.addi %0, %arg1 : i32
    %c0_i32 = arith.constant 0 : i32
    %2 = arith.minsi %1, %c0_i32 : i32
    %c0_i32_0 = arith.constant 0 : i32
    %c0_i32_1 = arith.constant 0 : i32
    %c0_i32_2 = arith.constant 0 : i32
    return %c0_i32_0, %2, %c0_i32_1 : i32, i32, i32
  }
  func.func @transform_1(%arg0: i32, %arg1: i32) -> (i32, i32) {
    %c1_i32 = arith.constant 1 : i32
    %0 = arith.muli %arg0, %c1_i32 : i32
    %1 = arith.addi %0, %arg1 : i32
    %c0_i32 = arith.constant 0 : i32
    %2 = arith.minsi %1, %c0_i32 : i32
    %c0_i32_0 = arith.constant 0 : i32
    %c0_i32_1 = arith.constant 0 : i32
    return %2, %c0_i32_0 : i32, i32
  }
  func.func @transform_2(%arg0: i32, %arg1: i32) -> (i32, i32) {
    %c0_i32 = arith.constant 0 : i32
    %c0_i32_0 = arith.constant 0 : i32
    return %arg0, %c0_i32 : i32, i32
  }
}

</mosaic_0001>

<llo_original>
// kernel: tpu_custom_call.1
$region0: #{tpu_custom_call.1}
  #allocation0 [shape = 'u32[]', space=smem, size = 0x4, offset = 0x4, fixed_abs, tag = 'smem constant byte address 0x4 - core index']
  #allocation1 [shape = 'u32[144,128]{1,0:T(1,128)}', space=vmem, size = 0x12000, scoped, tag = 'internal scratch']
  #allocation6 [shape = 's32[]', space=sflag, size = 0x4, offset = 0, fixed_abs, tag = 'sflag constant byte address 0x0 - dummy sync flag']
  %s0 = inlined_call_operand.hbm [shape: f32[2,2,128], index: 0, kind: input, shape index: {}]
  %s1 = inlined_call_operand.vmem [shape: f32[2,4], index: 1, kind: input, shape index: {}]
  %s2 = inlined_call_operand.hbm [shape: f32[8,128], index: 2, kind: output, shape index: {}]
  %s3 = sld [smem:[#allocation0]]
  $region38: #{tpu_custom_call.1} parent=0
    _
  %s5 = ssub.s32 1, %s3
  %s6 = scalar_select 0, %s5, %s3
  $region1: #{tpu_custom_call.1} parent=0
    #allocation2 [shape = 'u8[8192]{0}', space=vmem, size = 0x2000, scoped, tag = 'input window, operand 0, single buffered']
    #allocation3 [shape = 's32[1]{0}', space=sflag, size = 0x4, scoped, tag = 'scoped memory for tpu_custom_call.1']
    #allocation4 [shape = 's32[1]{0}', space=sflag, size = 0x4, scoped, tag = 'scoped memory for tpu_custom_call.1']
    #allocation5 [shape = 'u8[4096]{0}', space=vmem, size = 0x1000, scoped, tag = 'output window, operand 0, single buffered']
    %7 = vsyncpa [#allocation3], 0
    %8 = vsyncpa [#allocation4], 0
    // Predicated region
    $region2: #{tpu_custom_call.1} parent=1 // pred_check
      _
    $region3: #{tpu_custom_call.1} parent=1 // pred_check_branch
      %10 = sbr.rel (0) target = $region5
    $region4: #{tpu_custom_call.1} parent=1 // pred_region
      #allocation7 [shape = 'u32[6]{0}', space=smem, size = 0x18, scoped, tag = 'DMA stride descriptor']
      %s11 = sadd.s32 0, 0
      %p12 = scmp.lt.s32.totalorder %s11, 0
      %s13 = scalar_select %p12, %s11, 0
      %s14 = smul.u32 4, %s13
      %s15 = ssub.s32 1, %s14
      %s16 = smul.u32 64, %s15
      %s18 = ssub.s32 256, %s16
      %19 = vsyncadd [#allocation3], %s18
      %p20 = scmp.ne.s32.totalorder 0, %s16
      %s21 = smul.addr %s14, 32
      %s22 = scalar_lea.hbm %s0, %s21
      %s23 = smul.u32 2, %s15
      %s24 = smul.u32 %s23, 2
      %s26 = sshll.u32 1, 14
      %s27 = sxor.u32 4294967295, %s26
      %s29 = sld [smem:[#allocation0]]
      %s30 = sadd.s32 2, %s29
      %s32 = sshll.u32 7, 26
      %s33 = sxor.u32 4294967295, %s32
      %s34 = sand.u32 0, %s33
      %s35 = sshll.u32 %s30, 26
      %s36 = sor.u32 %s34, %s35
      %s37 = sshll.u32 [#allocation2], 4
      %s38 = int_to_ptr.vmem [resolvable:$true] %s37
      %s39 = sshll.u32 %s24, 4
      %44 = sst [smem:[#allocation7]] 32
      %s45 = scalar_lea.smem [#allocation7], 1
      %46 = sst [smem:[%s45]] 128
      %s47 = scalar_lea.smem [#allocation7], 2
      %48 = sst [smem:[%s47]] %s15
      %s49 = scalar_lea.smem [#allocation7], 3
      %50 = sst [smem:[%s49]] 32
      %s51 = scalar_lea.smem [#allocation7], 4
      %52 = sst [smem:[%s51]] 32
      %s53 = scalar_lea.smem [#allocation7], 5
      %54 = sst [smem:[%s53]] 2
      %56 = dma.general (%p20), %s22, %s39, %s38, [#allocation3], [#allocation6], [#allocation7], %s36, 0
    $region5: #{tpu_custom_call.1} parent=1 // pred_fallthru
      _
    // Predicated region
    $region6: #{tpu_custom_call.1} parent=1 // pred_check
      _
    $region7: #{tpu_custom_call.1} parent=1 // pred_check_branch
      %58 = sbr.rel (0) target = $region9
    $region8: #{tpu_custom_call.1} parent=1 // pred_region
      %s59 = sadd.s32 0, 0
      %p60 = scmp.lt.s32.totalorder %s59, 0
      %s61 = scalar_select %p60, %s59, 0
      %s62 = smul.u32 4, %s61
      %s63 = ssub.s32 1, %s62
      %s64 = smul.u32 32, %s63
      %p65 = scmp.lt.s32.totalorder %s62, 0
      %s66 = scalar_select %p65, %s62, 0
      %s67 = smul.addr %s66, 2
      %s68 = scalar_lea.vmem %s1, %s67
      %s69 = sadd.s32 0, 0
      %p70 = scmp.lt.s32.totalorder %s69, 0
      %s71 = scalar_select %p70, %s69, 0
      %s72 = smul.u32 4, %s71
      %s73 = ssub.s32 1, %s72
      %s74 = smul.u32 32, %s73
    $region9: #{tpu_custom_call.1} parent=1 // pred_fallthru
      _
    // Predicated region
    $region10: #{tpu_custom_call.1} parent=1 // pred_check
      _
    $region11: #{tpu_custom_call.1} parent=1 // pred_check_branch
      %76 = sbr.rel (0) target = $region13
    $region12: #{tpu_custom_call.1} parent=1 // pred_region
      %77 = dma.done [#allocation3], 256
    $region13: #{tpu_custom_call.1} parent=1 // pred_fallthru
      _
    %s78 = sadd.s32 0, 0
    %p79 = scmp.lt.s32.totalorder %s78, 0
    %s80 = scalar_select %p79, %s78, 0
    %s81 = smul.u32 4, %s80
    %s82 = ssub.s32 1, %s81
    %s83 = smul.u32 32, %s82
    %p84 = scmp.lt.s32.totalorder %s81, 0
    %s85 = scalar_select %p84, %s81, 0
    %s86 = smul.addr %s85, 2
    %s87 = scalar_lea.vmem %s1, %s86
    %s88 = sadd.s32 0, 0
    %p89 = scmp.lt.s32.totalorder %s88, 0
    %s90 = scalar_select %p89, %s88, 0
    %s91 = smul.u32 4, %s90
    %s92 = ssub.s32 1, %s91
    %s93 = smul.u32 64, %s92
    %s94 = sadd.s32 0, 0
    %p95 = scmp.lt.s32.totalorder %s94, 0
    %s96 = scalar_select %p95, %s94, 0
    %s97 = smul.u32 4, %s96
    %s98 = ssub.s32 1, %s97
    %s99 = smul.u32 32, %s98
    %p100 = scmp.lt.s32.totalorder %s97, 0
    %s101 = scalar_select %p100, %s97, 0
    %s102 = smul.addr %s101, 2
    %s103 = scalar_lea.vmem %s1, %s102
    %s104 = sadd.s32 0, 0
    %p105 = scmp.lt.s32.totalorder %s104, 0
    %s106 = scalar_select %p105, %s104, 0
    %s107 = smul.u32 4, %s106
    %s108 = ssub.s32 1, %s107
    %s109 = smul.u32 32, %s108
    %p110 = scmp.eq.s32.totalorder 0, 0
    // Predicated region
    $region14: #{tpu_custom_call.1} parent=1 // pred_check
      %p111 = pneg %p110
    $region15: #{tpu_custom_call.1} parent=1 // pred_check_branch
      %113 = sbr.rel (%p111) target = $region17
    $region16: #{tpu_custom_call.1} parent=1 // pred_region
      %114 = vst [vmem:[#allocation5] sm:$0xff] 0.0
    $region17: #{tpu_custom_call.1} parent=1 // pred_fallthru
      _
    %v115 = vld [vmem:[#allocation2] sm:$0xff]
    %s116 = scalar_lea.vmem [#allocation2], 8
    %v117 = vld [vmem:[%s116] sm:$0xff]
    %v118 = vsub.f32 %v115, %v117
    %v119 = vadd.f32 %v118, 1e-06
    %v120 = vmul.f32 %v119, %v119
    %v121 = vlaneseq
    %v122 = vshrl.u32 %v121, 7
    %v123 = vadd.s32 %v122, 8
    %v124 = vadd.s32 %v122, 16
    %v125 = vadd.s32 %v122, 24
    %v126 = vadd.s32 %v122, 32
    %v127 = vadd.s32 %v122, 40
    %v128 = vadd.s32 %v122, 48
    %v129 = vadd.s32 %v122, 56
    %v130 = vadd.s32 %v122, 64
    %v131 = vadd.s32 %v122, 72
    %v132 = vadd.s32 %v122, 80
    %v133 = vadd.s32 %v122, 88
    %v134 = vadd.s32 %v122, 96
    %v135 = vadd.s32 %v122, 104
    %v136 = vadd.s32 %v122, 112
    %v137 = vadd.s32 %v122, 120
    %v138 = vlaneseq
    %v139 = vand.u32 %v138, 127
    %v140 = vmul.u32 %v139, 32
    %vm141 = vcmp.ge.s32.totalorder %v122, %v140
    %vm142 = vcmp.ge.s32.totalorder %v123, %v140
    %vm143 = vcmp.ge.s32.totalorder %v124, %v140
    %vm144 = vcmp.ge.s32.totalorder %v125, %v140
    %vm145 = vcmp.ge.s32.totalorder %v126, %v140
    %vm146 = vcmp.ge.s32.totalorder %v127, %v140
    %vm147 = vcmp.ge.s32.totalorder %v128, %v140
    %vm148 = vcmp.ge.s32.totalorder %v129, %v140
    %vm149 = vcmp.ge.s32.totalorder %v130, %v140
    %vm150 = vcmp.ge.s32.totalorder %v131, %v140
    %vm151 = vcmp.ge.s32.totalorder %v132, %v140
    %vm152 = vcmp.ge.s32.totalorder %v133, %v140
    %vm153 = vcmp.ge.s32.totalorder %v134, %v140
    %vm154 = vcmp.ge.s32.totalorder %v135, %v140
    %vm155 = vcmp.ge.s32.totalorder %v136, %v140
    %vm156 = vcmp.ge.s32.totalorder %v137, %v140
    %v157 = vadd.s32 %v139, 1
    %v158 = vmul.u32 %v157, 32
    %vm159 = vcmp.lt.s32.totalorder %v122, %v158
    %vm160 = vcmp.lt.s32.totalorder %v123, %v158
    %vm161 = vcmp.lt.s32.totalorder %v124, %v158
    %vm162 = vcmp.lt.s32.totalorder %v125, %v158
    %vm163 = vcmp.lt.s32.totalorder %v126, %v158
    %vm164 = vcmp.lt.s32.totalorder %v127, %v158
    %vm165 = vcmp.lt.s32.totalorder %v128, %v158
    %vm166 = vcmp.lt.s32.totalorder %v129, %v158
    %vm167 = vcmp.lt.s32.totalorder %v130, %v158
    %vm168 = vcmp.lt.s32.totalorder %v131, %v158
    %vm169 = vcmp.lt.s32.totalorder %v132, %v158
    %vm170 = vcmp.lt.s32.totalorder %v133, %v158
    %vm171 = vcmp.lt.s32.totalorder %v134, %v158
    %vm172 = vcmp.lt.s32.totalorder %v135, %v158
    %vm173 = vcmp.lt.s32.totalorder %v136, %v158
    %vm174 = vcmp.lt.s32.totalorder %v137, %v158
    %vm175 = vmand %vm141, %vm159
    %vm176 = vmand %vm142, %vm160
    %vm177 = vmand %vm143, %vm161
    %vm178 = vmand %vm144, %vm162
    %vm179 = vmand %vm145, %vm163
    %vm180 = vmand %vm146, %vm164
    %vm181 = vmand %vm147, %vm165
    %vm182 = vmand %vm148, %vm166
    %vm183 = vmand %vm149, %vm167
    %vm184 = vmand %vm150, %vm168
    %vm185 = vmand %vm151, %vm169
    %vm186 = vmand %vm152, %vm170
    %vm187 = vmand %vm153, %vm171
    %vm188 = vmand %vm154, %vm172
    %vm189 = vmand %vm155, %vm173
    %vm190 = vmand %vm156, %vm174
    %v191 = vsel %vm175, 1, 0
    %v192 = vsel %vm176, 1, 0
    %v193 = vsel %vm177, 1, 0
    %v194 = vsel %vm178, 1, 0
    %v195 = vsel %vm179, 1, 0
    %v196 = vsel %vm180, 1, 0
    %v197 = vsel %vm181, 1, 0
    %v198 = vsel %vm182, 1, 0
    %v199 = vsel %vm183, 1, 0
    %v200 = vsel %vm184, 1, 0
    %v201 = vsel %vm185, 1, 0
    %v202 = vsel %vm186, 1, 0
    %v203 = vsel %vm187, 1, 0
    %v204 = vsel %vm188, 1, 0
    %v205 = vsel %vm189, 1, 0
    %v206 = vsel %vm190, 1, 0
    %v207 = vcvt.s32.f32 %v191
    %v208 = vcvt.s32.f32 %v192
    %v209 = vcvt.s32.f32 %v193
    %v210 = vcvt.s32.f32 %v194
    %v211 = vcvt.s32.f32 %v195
    %v212 = vcvt.s32.f32 %v196
    %v213 = vcvt.s32.f32 %v197
    %v214 = vcvt.s32.f32 %v198
    %v215 = vcvt.s32.f32 %v199
    %v216 = vcvt.s32.f32 %v200
    %v217 = vcvt.s32.f32 %v201
    %v218 = vcvt.s32.f32 %v202
    %v219 = vcvt.s32.f32 %v203
    %v220 = vcvt.s32.f32 %v204
    %v221 = vcvt.s32.f32 %v205
    %v222 = vcvt.s32.f32 %v206
    %223 = vmatprep.subr.mxu0 0.0
    %224 = vmatpush1.msra.mxu0 %v207
    %225 = vmatprep.subr.mxu0 0.0
    %226 = vmatpush1.msra.mxu0 %v208
    %227 = vmatprep.subr.mxu0 0.0
    %228 = vmatpush1.msra.mxu0 %v209
    %229 = vmatprep.subr.mxu0 0.0
    %230 = vmatpush1.msra.mxu0 %v210
    %231 = vmatprep.subr.mxu0 0.0
    %232 = vmatpush1.msra.mxu0 %v211
    %233 = vmatprep.subr.mxu0 0.0
    %234 = vmatpush1.msra.mxu0 %v212
    %235 = vmatprep.subr.mxu0 0.0
    %236 = vmatpush1.msra.mxu0 %v213
    %237 = vmatprep.subr.mxu0 0.0
    %238 = vmatpush1.msra.mxu0 %v214
    %239 = vmatprep.subr.mxu0 0.0
    %240 = vmatpush1.msra.mxu0 %v215
    %241 = vmatprep.subr.mxu0 0.0
    %242 = vmatpush1.msra.mxu0 %v216
    %243 = vmatprep.subr.mxu0 0.0
    %244 = vmatpush1.msra.mxu0 %v217
    %245 = vmatprep.subr.mxu0 0.0
    %246 = vmatpush1.msra.mxu0 %v218
    %247 = vmatprep.subr.mxu0 0.0
    %248 = vmatpush1.msra.mxu0 %v219
    %249 = vmatprep.subr.mxu0 0.0
    %250 = vmatpush1.msra.mxu0 %v220
    %251 = vmatprep.subr.mxu0 0.0
    %252 = vmatpush1.msra.mxu0 %v221
    %253 = vmatprep.subr.mxu0 0.0
    %254 = vmatpush1.msra.mxu0 %v222
    %255 = vmatprep.subr.mxu0 0.0
    %256 = vmatpush1.msra.mxu0 0.0
    %257 = vmatprep.subr.mxu0 0.0
    %258 = vmatpush1.msra.mxu0 0.0
    %259 = vmatprep.subr.mxu0 0.0
    %260 = vmatpush1.msra.mxu0 0.0
    %261 = vmatprep.subr.mxu0 0.0
    %262 = vmatpush1.msra.mxu0 0.0
    %263 = vmatprep.subr.mxu0 0.0
    %264 = vmatpush1.msra.mxu0 0.0
    %265 = vmatprep.subr.mxu0 0.0
    %266 = vmatpush1.msra.mxu0 0.0
    %267 = vmatprep.subr.mxu0 0.0
    %268 = vmatpush1.msra.mxu0 0.0
    %269 = vmatprep.subr.mxu0 0.0
    %270 = vmatpush1.msra.mxu0 0.0
    %271 = vmatprep.subr.mxu0 0.0
    %272 = vmatpush1.msra.mxu0 0.0
    %273 = vmatprep.subr.mxu0 0.0
    %274 = vmatpush1.msra.mxu0 0.0
    %275 = vmatprep.subr.mxu0 0.0
    %276 = vmatpush1.msra.mxu0 0.0
    %277 = vmatprep.subr.mxu0 0.0
    %278 = vmatpush1.msra.mxu0 0.0
    %279 = vmatprep.subr.mxu0 0.0
    %280 = vmatpush1.msra.mxu0 0.0
    %281 = vmatprep.subr.mxu0 0.0
    %282 = vmatpush1.msra.mxu0 0.0
    %283 = vmatprep.subr.mxu0 0.0
    %284 = vmatpush1.msra.mxu0 0.0
    %285 = vmatprep.subr.mxu0 0.0
    %286 = vmatpush1.msra.mxu0 0.0
    %287 = vmatprep.mubr.f32.mxu0 0.0
    %288 = vmatmul.mubr.f32.gmra.mrb[0].mxu0 %v120
    %v289 = vpop.f32.mrb[0].mxu0
    %v290 = vadd.f32 0.0, %v289
    %v291 = vpop.f32.mrb[0].mxu0
    %292 = vdwg.mxu0
    %v293 = vrsqrt.pop %v290
    %v294 = vmul.f32 %v290, %v293
    %vm295 = vcmp.eq.f32.partialorder %v290, inf
    %v296 = vsel %vm295, %v290, %v294
    %vm297 = vcmp.eq.f32.partialorder %v290, 0.0
    %v298 = vand.u32 %v290, 2147483648
    %v299 = vsel %vm297, %v298, %v296
    %v300 = vld [vmem:[%s103] sm:$0xff]
    %v301 = vsub.f32 2.0, %v299
    %v302 = vmax.f32 %v301, 0.0
    %v303 = vmul.f32 %v300, %v290
    %v304 = vsub.f32 1.0, %v300
    %v305 = vmul.f32 %v302, %v302
    %v306 = vmul.f32 %v304, %v305
    %v307 = vadd.f32 %v303, %v306
    %s308 = sadd.s32 0, 0
    %s309 = smul.u32 %s308, 8
    %s310 = sadd.s32 %s309, 8
    %p311 = scmp.le.s32.totalorder %s310, 2
    // Predicated region
    $region18: #{tpu_custom_call.1} parent=1 // pred_check
      %p312 = pneg %p311
    $region19: #{tpu_custom_call.1} parent=1 // pred_check_branch
      %314 = sbr.rel (%p312) target = $region21
    $region20: #{tpu_custom_call.1} parent=1 // pred_region
      %v315 = vld [vmem:[#allocation5] sm:$0xff]
      %vm316 = vcmask 31744
      %v317 = vsel %vm316, %v307, 0.0
      %318 = vadd.xlane.f32.xlu0 %v317
      %v319 = vpop.xlane.xlu0 %318
      %v320 = vrot.slane %v319, 4
      %v321 = vadd.f32 %v319, %v320
      %v322 = vrot.slane %v321, 2
      %v323 = vadd.f32 %v321, %v322
      %v324 = vrot.slane %v323, 1
      %v325 = vadd.f32 %v323, %v324
      %s326 = vtos %v325
      %v327 = vstv %s326
      %v328 = vadd.f32 %v315, %v327
      %329 = vst [vmem:[#allocation5] sm:$0xff] %v328
    $region21: #{tpu_custom_call.1} parent=1 // pred_fallthru
      _
    %p330 = scmp.gt.s32.totalorder %s310, 2
    // Predicated region
    $region22: #{tpu_custom_call.1} parent=1 // pred_check
      %p331 = pneg %p330
    $region23: #{tpu_custom_call.1} parent=1 // pred_check_branch
      %333 = sbr.rel (%p331) target = $region25
    $region24: #{tpu_custom_call.1} parent=1 // pred_region
      %v334 = vstv %s309
      %v335 = vadd.s32 %v334, %v122
      %v336 = vld [vmem:[#allocation5] sm:$0xff]
      %vm337 = vcmp.lt.s32.totalorder %v335, 2
      %v338 = vsel %vm337, %v307, 0.0
      %vm339 = vcmask 31744
      %v340 = vsel %vm339, %v338, 0.0
      %341 = vadd.xlane.f32.xlu0 %v340
      %v342 = vpop.xlane.xlu0 %341
      %v343 = vrot.slane %v342, 4
      %v344 = vadd.f32 %v342, %v343
      %v345 = vrot.slane %v344, 2
      %v346 = vadd.f32 %v344, %v345
      %v347 = vrot.slane %v346, 1
      %v348 = vadd.f32 %v346, %v347
      %s349 = vtos %v348
      %v350 = vstv %s349
      %v351 = vadd.f32 %v336, %v350
      %352 = vst [vmem:[#allocation5] sm:$0xff] %v351
    $region25: #{tpu_custom_call.1} parent=1 // pred_fallthru
      _
    // Predicated region
    $region26: #{tpu_custom_call.1} parent=1 // pred_check
      %p353 = pneg %p110
    $region27: #{tpu_custom_call.1} parent=1 // pred_check_branch
      %355 = sbr.rel (%p353) target = $region29
    $region28: #{tpu_custom_call.1} parent=1 // pred_region
      %v356 = vld [vmem:[#allocation5] sm:$0xff]
      %v357 = vmul.f32 %v356, 0.125
      %358 = vst [vmem:[#allocation5] sm:$0xff] %v357
    $region29: #{tpu_custom_call.1} parent=1 // pred_fallthru
      _
    // Predicated region
    $region30: #{tpu_custom_call.1} parent=1 // pred_check
      _
    $region31: #{tpu_custom_call.1} parent=1 // pred_check_branch
      %360 = sbr.rel (0) target = $region33
    $region32: #{tpu_custom_call.1} parent=1 // pred_region
      %s362 = ssub.s32 128, 128
      %363 = vsyncadd [#allocation4], %s362
      %s365 = sshll.u32 [#allocation5], 4
      %s366 = int_to_ptr.vmem [resolvable:$true] %s365
      %368 = dma.vmem_to_hbm [thread:$0]  %s366, 128, %s2, [#allocation4]
    $region33: #{tpu_custom_call.1} parent=1 // pred_fallthru
      _
    // Predicated region
    $region34: #{tpu_custom_call.1} parent=1 // pred_check
      _
    $region35: #{tpu_custom_call.1} parent=1 // pred_check_branch
      %370 = sbr.rel (0) target = $region37
    $region36: #{tpu_custom_call.1} parent=1 // pred_region
      %371 = dma.done [#allocation4], 128
    $region37: #{tpu_custom_call.1} parent=1 // pred_fallthru
      _
    %372 = vsyncpa [#allocation3], 1
    %373 = vsyncpa [#allocation4], 1

</llo_original>
